<compile_context>
chip_gen: v5e
topology: v5e:2x2
jax: 0.10.0
libtpu: 0.0.40
codegen_flags: <defaults>
</compile_context>

<pallas_src>
from functools import partial

import jax
import jax.numpy as jnp
from jax import lax
from jax.experimental import pallas as pl
from jax.experimental.pallas import tpu as pltpu


# ------------------------------ small helpers -------------------------------

def _round_up(x, m):
    return (x + m - 1) // m * m


def _pad2(a, rows, cols):
    r, c = a.shape
    if r == rows and c == cols:
        return a
    return jnp.pad(a, ((0, rows - r), (0, cols - c)))


def _vmem_capacity():
    """Per-TensorCore VMEM bytes (generation-aware tiling / vmem_limit)."""
    try:
        info_fn = getattr(pltpu, "get_tpu_info", None)
        if info_fn is not None:
            cap = int(getattr(info_fn(), "vmem_capacity_bytes", 0))
            if cap > 0:
                return cap
    except Exception:
        pass
    return 64 << 20        # conservative default: v7x per-TC VMEM


def _choose_tm(M, fixed_bytes, per_row_bytes, budget):
    """Largest row tile that (a) fits the VMEM budget, (b) divides the
    8-padded M (no row padding of the big patch matrix) and (c) leaves >= 2
    grid blocks for megacore / v7x's 2 TensorCores when possible."""
    M8 = _round_up(M, 8)
    tm_cap = (budget - fixed_bytes) // max(per_row_bytes, 1)
    tm_cap = max(8, tm_cap // 8 * 8)
    cands = [c for c in (2048, 1024, 512, 256, 128, 64, 32, 16, 8)
             if c <= tm_cap and c <= M8]
    if not cands:
        return 8, _round_up(M, 8)
    for c in cands:                       # no padding and >= 2 parallel blocks
        if M8 % c == 0 and M8 // c >= 2:
            return c, M8
    for c in cands:                       # no padding
        if M8 % c == 0:
            return c, M8
    tm = cands[0]
    return tm, _round_up(M, tm)


# ----------------------------- Pallas kernels --------------------------------

def _gemm_bn_kernel(p_ref, w_ref, b_ref, o_ref, *, relu):
    """Single-shot (tm,K)x(K,N) GEMM + folded-BN bias (+ReLU)."""
    y = jnp.dot(p_ref[...], w_ref[...], preferred_element_type=jnp.float32)
    y = y + b_ref[...]
    if relu:
        y = jnp.maximum(y, 0.0)
    o_ref[...] = y.astype(o_ref.dtype)


def _gemm_bn_res_kernel(p_ref, w_ref, b_ref, r_ref, o_ref, *, relu):
    """Single-shot GEMM + folded-BN bias + (bf16) identity residual."""
    y = jnp.dot(p_ref[...], w_ref[...], preferred_element_type=jnp.float32)
    y = y + b_ref[...] + r_ref[...].astype(jnp.float32)
    if relu:
        y = jnp.maximum(y, 0.0)
    o_ref[...] = y.astype(o_ref.dtype)


def _gemm_bn_acc_kernel(p_ref, w_ref, b_ref, o_ref, acc_ref, *, relu):
    """k-tiled fallback (huge K): direct store at k==0, accumulate after."""
    k = pl.program_id(1)
    part = jnp.dot(p_ref[...], w_ref[...], preferred_element_type=jnp.float32)

    @pl.when(k == 0)
    def _():
        acc_ref[...] = part               # no zero-init + RMW pass

    @pl.when(k > 0)
    def _():
        acc_ref[...] += part

    @pl.when(k == pl.num_programs(1) - 1)
    def _():
        y = acc_ref[...] + b_ref[...]
        if relu:
            y = jnp.maximum(y, 0.0)
        o_ref[...] = y.astype(o_ref.dtype)


def _gemm_bn_res_acc_kernel(p_ref, w_ref, b_ref, r_ref, o_ref, acc_ref, *,
                            relu):
    """k-tiled fallback with bf16 identity residual."""
    k = pl.program_id(1)
    part = jnp.dot(p_ref[...], w_ref[...], preferred_element_type=jnp.float32)

    @pl.when(k == 0)
    def _():
        acc_ref[...] = part

    @pl.when(k > 0)
    def _():
        acc_ref[...] += part

    @pl.when(k == pl.num_programs(1) - 1)
    def _():
        y = acc_ref[...] + b_ref[...] + r_ref[...].astype(jnp.float32)
        if relu:
            y = jnp.maximum(y, 0.0)
        o_ref[...] = y.astype(o_ref.dtype)


# ----------------------------- GEMM dispatcher --------------------------------

def _fused_conv_gemm(patches, w_scaled, bias, *, relu=False, residual=None,
                     out_dtype=jnp.float32):
    """conv-as-GEMM with folded BN (+ReLU / +identity residual).

    patches : (M, K)  bf16  im2col patches (downsample pixels may be
                            concatenated along K by the caller)
    w_scaled: (K, Cout) f32 BN-scale-folded conv weights in GEMM layout
    bias    : (Cout,)  f32  folded BN bias (+ folded conv bias)
    residual: optional (M, Cout) identity residual (streamed bf16, added f32)
    Returns (M, Cout) in `out_dtype`.
    """
    M, K = patches.shape
    Kw, Cout = w_scaled.shape
    assert K == Kw
    N_pad = _round_up(Cout, 128)
    K_pad = _round_up(K, 128)            # lane-aligned MXU contraction
    out_b = jnp.dtype(out_dtype).itemsize
    res_b = 2 if residual is not None else 0

    cap = _vmem_capacity()
    budget = int(0.45 * cap)

    # Preferred: one full-K / full-N block per row tile -> no accumulator
    # pass, weights resident across the whole (1-D, all-parallel) grid.
    fixed = 2 * (K_pad * N_pad * 2 + N_pad * 4)
    per_row = 2 * (K_pad * 2 + N_pad * (out_b + res_b))
    single_k = fixed + 8 * per_row <= budget

    if single_k:
        tk = K_pad
        tm, M_pad = _choose_tm(M, fixed, per_row, budget)
        grid = (M_pad // tm,)
        dim_sem = ("parallel",)
        p_spec = pl.BlockSpec((tm, tk), lambda i: (i, 0))
        w_spec = pl.BlockSpec((tk, N_pad), lambda i: (0, 0))
        b_spec = pl.BlockSpec((1, N_pad), lambda i: (0, 0))
        r_spec = pl.BlockSpec((tm, N_pad), lambda i: (i, 0))
        o_spec = pl.BlockSpec((tm, N_pad), lambda i: (i, 0))
        scratch = []
    else:
        # Huge-K fallback: >=256-deep k tiles (v6e/v7x MXU) + f32 accumulator.
        tk = 512 if K_pad >= 512 else 256
        K_pad = _round_up(K_pad, tk)
        fixed = 2 * (tk * N_pad * 2 + N_pad * 4)
        per_row = 2 * (tk * 2 + N_pad * (out_b + res_b)) + N_pad * 4
        tm, M_pad = _choose_tm(M, fixed, per_row, budget)
        grid = (M_pad // tm, K_pad // tk)
        dim_sem = ("parallel", "arbitrary")
        p_spec = pl.BlockSpec((tm, tk), lambda i, k: (i, k))
        w_spec = pl.BlockSpec((tk, N_pad), lambda i, k: (k, 0))
        b_spec = pl.BlockSpec((1, N_pad), lambda i, k: (0, 0))
        r_spec = pl.BlockSpec((tm, N_pad), lambda i, k: (i, 0))
        o_spec = pl.BlockSpec((tm, N_pad), lambda i, k: (i, 0))
        scratch = [pltpu.VMEM((tm, N_pad), jnp.float32)]
    est = fixed + tm * per_row

    # Zero-pad to tile multiples (fused by XLA with the im2col producer);
    # padded K rows of the weights are zero so padded lanes contribute 0.
    p_pad = _pad2(patches.astype(jnp.bfloat16), M_pad, K_pad)
    w_pad = _pad2(w_scaled, K_pad, N_pad).astype(jnp.bfloat16)
    b_pad = _pad2(bias.reshape(1, -1).astype(jnp.float32), 1, N_pad)

    in_specs = [p_spec, w_spec, b_spec]
    args = [p_pad, w_pad, b_pad]
    if residual is not None:
        in_specs.append(r_spec)
        args.append(_pad2(residual.astype(jnp.bfloat16), M_pad, N_pad))
        kern = _gemm_bn_res_kernel if single_k else _gemm_bn_res_acc_kernel
    else:
        kern = _gemm_bn_kernel if single_k else _gemm_bn_acc_kernel

    vmem_limit = int(min(max(2 * est, 32 << 20), int(0.7 * cap)))
    flops = 2 * M_pad * K_pad * N_pad
    bytes_accessed = int(sum(a.size * a.dtype.itemsize for a in args)
                         + M_pad * N_pad * out_b)

    out = pl.pallas_call(
        partial(kern, relu=relu),
        out_shape=jax.ShapeDtypeStruct((M_pad, N_pad), out_dtype),
        grid=grid,
        in_specs=in_specs,
        out_specs=o_spec,
        scratch_shapes=scratch,
        compiler_params=pltpu.CompilerParams(
            dimension_semantics=dim_sem,
            vmem_limit_bytes=vmem_limit),
        cost_estimate=pl.CostEstimate(flops=flops, transcendentals=0,
                                      bytes_accessed=bytes_accessed),
    )(*args)
    return out[:M, :Cout]


# -------------------------------- JAX glue -----------------------------------

def _im2col(x_nhwc, kh, kw, stride, pad):
    """Extract conv patches. Returns (N*Ho*Wo, kh*kw*C), Ho, Wo."""
    N, H, W, C = x_nhwc.shape
    xp = jnp.pad(x_nhwc, ((0, 0), (pad, pad), (pad, pad), (0, 0)))
    Ho = (H + 2 * pad - kh) // stride + 1
    Wo = (W + 2 * pad - kw) // stride + 1
    cols = []
    for i in range(kh):
        for j in range(kw):
            cols.append(xp[:, i:i + stride * Ho:stride,
                           j:j + stride * Wo:stride, :])
    p = jnp.stack(cols, axis=3)                      # (N, Ho, Wo, kh*kw, C)
    return p.reshape(N * Ho * Wo, kh * kw * C), Ho, Wo


def _weight_to_gemm(w):
    """(Cout, Cin, kh, kw) -> (kh*kw*Cin, Cout), matching _im2col K order."""
    cout, cin, kh, kw = w.shape
    return jnp.transpose(w, (2, 3, 1, 0)).reshape(kh * kw * cin, cout)


def _fold_bn(gamma, beta, mean, var, conv_bias=None, eps=1e-5):
    s = gamma / jnp.sqrt(var + eps)
    b = beta - mean * s
    if conv_bias is not None:
        b = b + conv_bias * s
    return s, b


def block_forward(x_nchw, params, stride=2):
    """Pallas implementation of the PyTorch `block.forward` (inference BN)."""
    x = jnp.transpose(x_nchw, (0, 2, 3, 1))                      # NHWC
    N, H, W, Cin = x.shape
    Cout = params["conv1_w"].shape[0]
    x_bf = x.astype(jnp.bfloat16)

    s1, b1 = _fold_bn(params["bn1_gamma"], params["bn1_beta"],
                      params["bn1_mean"], params["bn1_var"])
    s2, b2 = _fold_bn(params["bn2_gamma"], params["bn2_beta"],
                      params["bn2_mean"], params["bn2_var"])
    w1s = _weight_to_gemm(params["conv1_w"]) * s1[None, :]
    w2s = _weight_to_gemm(params["conv2_w"]) * s2[None, :]

    # --- conv1 (3x3/stride) + bn1 + relu: fused GEMM, bf16 intermediate ---
    p1, Ho, Wo = _im2col(x_bf, 3, 3, stride, 1)
    y1 = _fused_conv_gemm(p1, w1s, b1, relu=True, out_dtype=jnp.bfloat16)
    y1_nhwc = y1.reshape(N, Ho, Wo, Cout)

    # --- conv2 (3x3/1) + bn2 (+ downsample or identity residual) ---
    p2, Ho2, Wo2 = _im2col(y1_nhwc, 3, 3, 1, 1)

    if stride == 2 and Cin != Cout:
        # 1x1/stride downsample conv (+bias) + BN folded INTO the main GEMM:
        # its input pixels are appended along K and its scaled weights stacked
        # under w2, biases summed -> single MXU contraction, no epilogue matmul.
        sd, bd = _fold_bn(params["down_bn_gamma"], params["down_bn_beta"],
                          params["down_bn_mean"], params["down_bn_var"],
                          conv_bias=params["down_b"])
        wds = _weight_to_gemm(params["down_w"]) * sd[None, :]
        xd = x_bf[:, ::stride, ::stride, :].reshape(N * Ho * Wo, Cin)
        p_full = jnp.concatenate([p2, xd], axis=1)
        w_full = jnp.concatenate([w2s, wds], axis=0)
        out = _fused_conv_gemm(p_full, w_full, b2 + bd)
    else:
        # Identity(): only shape-compatible when stride == 1 and Cin == Cout
        # (same implicit constraint as the PyTorch module).
        assert stride == 1 and Cin == Cout, \
            "Identity residual requires stride == 1 and in_dim == out_dim"
        out = _fused_conv_gemm(p2, w2s, b2,
                               residual=x_bf.reshape(N * H * W, Cin))

    out = out.reshape(N, Ho2, Wo2, Cout)
    return jnp.transpose(out, (0, 3, 1, 2))                      # back to NCHW


# ------------------------------ references ----------------------------------

def _ref_forward_matched(x, params, stride=2, eps=1e-5):
    """XLA reference at matched precision (bf16 MXU inputs, f32 acc, folded BN)."""
    def conv(y, w, s, pad):
        return lax.conv_general_dilated(
            y.astype(jnp.bfloat16), w.astype(jnp.bfloat16), (s, s),
            [(pad, pad), (pad, pad)],
            dimension_numbers=("NCHW", "OIHW", "NCHW"),
            preferred_element_type=jnp.float32)

    s1, b1 = _fold_bn(params["bn1_gamma"], params["bn1_beta"],
                      params["bn1_mean"], params["bn1_var"], eps=eps)
    s2, b2 = _fold_bn(params["bn2_gamma"], params["bn2_beta"],
                      params["bn2_mean"], params["bn2_var"], eps=eps)
    sd, bd = _fold_bn(params["down_bn_gamma"], params["down_bn_beta"],
                      params["down_bn_mean"], params["down_bn_var"],
                      conv_bias=params["down_b"], eps=eps)
    w1 = params["conv1_w"] * s1[:, None, None, None]
    w2 = params["conv2_w"] * s2[:, None, None, None]
    wd = params["down_w"] * sd[:, None, None, None]

    xf = x.astype(jnp.float32)
    y = conv(xf, w1, stride, 1) + b1[None, :, None, None]
    y = jnp.maximum(y, 0.0)
    y = conv(y, w2, 1, 1) + b2[None, :, None, None]
    idn = conv(xf, wd, stride, 0) + bd[None, :, None, None]
    return y + idn


def _ref_forward_f32(x, params, stride=2, eps=1e-5):
    """Full-f32 semantic reference (PyTorch inference-mode block)."""
    def conv(y, w, s, pad):
        return lax.conv_general_dilated(
            y, w, (s, s), [(pad, pad), (pad, pad)],
            dimension_numbers=("NCHW", "OIHW", "NCHW"))

    def bn(y, g, b, m, v):
        g, b, m, v = (t[None, :, None, None] for t in (g, b, m, v))
        return (y - m) / jnp.sqrt(v + eps) * g + b

    h = x
    y = conv(x, params["conv1_w"], stride, 1)
    y = bn(y, params["bn1_gamma"], params["bn1_beta"],
           params["bn1_mean"], params["bn1_var"])
    y = jnp.maximum(y, 0.0)
    y = conv(y, params["conv2_w"], 1, 1)
    y = bn(y, params["bn2_gamma"], params["bn2_beta"],
           params["bn2_mean"], params["bn2_var"])
    idn = conv(h, params["down_w"], stride, 0) \
        + params["down_b"][None, :, None, None]
    idn = bn(idn, params["down_bn_gamma"], params["down_bn_beta"],
             params["down_bn_mean"], params["down_bn_var"])
    return y + idn


# ---------------------------------- main -------------------------------------

def _init_params(key, in_dim, out_dim):
    ks = jax.random.split(key, 8)
    p = {
        "conv1_w": 0.1 * jax.random.normal(ks[0], (out_dim, in_dim, 3, 3), jnp.float32),
        "conv2_w": 0.1 * jax.random.normal(ks[1], (out_dim, out_dim, 3, 3), jnp.float32),
        "down_w":  0.1 * jax.random.normal(ks[2], (out_dim, in_dim, 1, 1), jnp.float32),
        "down_b":  0.05 * jax.random.normal(ks[3], (out_dim,), jnp.float32),
    }
    for name, kg, kb in (("bn1", ks[4], ks[5]), ("bn2", ks[6], ks[7]),
                         ("down_bn", ks[4], ks[6])):
        p[f"{name}_gamma"] = 1.0 + 0.1 * jax.random.normal(kg, (out_dim,), jnp.float32)
        p[f"{name}_beta"] = 0.1 * jax.random.normal(kb, (out_dim,), jnp.float32)
        p[f"{name}_mean"] = 0.05 * jax.random.normal(kb, (out_dim,), jnp.float32)
        p[f"{name}_var"] = 1.0 + 0.1 * jax.random.uniform(kg, (out_dim,), jnp.float32)
    return p


if __name__ == "__main__":
    key = jax.random.PRNGKey(0)
    k_x, k_p = jax.random.split(key)

    N, IN_DIM, OUT_DIM, HW, STRIDE = 2, 4, 8, 16, 2
    x = jax.random.normal(k_x, (N, IN_DIM, HW, HW), jnp.float32)   # NCHW
    params = _init_params(k_p, IN_DIM, OUT_DIM)

    out = jax.jit(partial(block_forward, stride=STRIDE))(x, params)
    out = jax.block_until_ready(out)

    assert out.shape == (N, OUT_DIM, HW // STRIDE, HW // STRIDE), out.shape

    # Tight check vs. an XLA reference at matched precision (bf16 MXU inputs,
    # f32 accumulation, folded BN) -- validates the GEMM / fusion structure.
    ref_m = _ref_forward_matched(x, params, stride=STRIDE)
    assert jnp.allclose(out, ref_m, rtol=5e-3, atol=5e-3), \
        float(jnp.max(jnp.abs(out - ref_m)))

    # Loose check vs. the full-f32 PyTorch-semantics reference (covers the
    # bf16 quantization of the MXU inputs / intermediate).
    ref_f = _ref_forward_f32(x, params, stride=STRIDE)
    assert jnp.allclose(out, ref_f, rtol=1e-1, atol=1e-1), \
        float(jnp.max(jnp.abs(out - ref_f)))

    print("KERNEL_OK")
</pallas_src>

<mosaic_0001>
module attributes {stable_mosaic.version = 11 : i64} {
  func.func @_gemm_bn_kernel(%arg0: i32, %arg1: memref<64x128xbf16, #tpu.memory_space<vmem>>, %arg2: memref<128x128xbf16, #tpu.memory_space<vmem>>, %arg3: memref<1x128xf32, #tpu.memory_space<vmem>>, %arg4: memref<64x128xbf16, #tpu.memory_space<vmem>>) attributes {dimension_semantics = [#tpu.dimension_semantics<parallel>], iteration_bounds = array<i64: 2>, scalar_prefetch = 0 : i64, scratch_operands = 0 : i64, tpu.core_type = #tpu.core_type<tc>, window_params = [{transform_indices = @transform_0, window_bounds = array<i64: 64, 128>}, {pipeline_mode = #tpu.pipeline_mode<synchronous>, transform_indices = @transform_1, window_bounds = array<i64: 128, 128>}, {pipeline_mode = #tpu.pipeline_mode<synchronous>, transform_indices = @transform_2, window_bounds = array<i64: 1, 128>}, {transform_indices = @transform_3, window_bounds = array<i64: 64, 128>}]} {
    %c0 = arith.constant 0 : index
    %c0_0 = arith.constant 0 : index
    %0 = vector.load %arg1[%c0, %c0_0] : memref<64x128xbf16, #tpu.memory_space<vmem>>, vector<64x128xbf16>
    %c0_1 = arith.constant 0 : index
    %c0_2 = arith.constant 0 : index
    %1 = vector.load %arg2[%c0_1, %c0_2] : memref<128x128xbf16, #tpu.memory_space<vmem>>, vector<128x128xbf16>
    %cst = arith.constant dense<0.000000e+00> : vector<64x128xf32>
    %2 = tpu.matmul %0, %1, %cst {dimension_numbers = #tpu.dot_dimension_numbers<[1], [0], [0], [1], [0, 0, 1, 1], [], []>} : vector<64x128xbf16>, vector<128x128xbf16>, vector<64x128xf32> -> vector<64x128xf32>
    %c0_3 = arith.constant 0 : index
    %c0_4 = arith.constant 0 : index
    %3 = vector.load %arg3[%c0_3, %c0_4] : memref<1x128xf32, #tpu.memory_space<vmem>>, vector<1x128xf32>
    %4 = vector.broadcast %3 : vector<1x128xf32> to vector<64x128xf32>
    %5 = arith.addf %2, %4 : vector<64x128xf32>
    %cst_5 = arith.constant 0.000000e+00 : f32
    %6 = vector.broadcast %cst_5 : f32 to vector<64x128xf32>
    %7 = arith.maximumf %5, %6 : vector<64x128xf32>
    %8 = arith.truncf %7 : vector<64x128xf32> to vector<64x128xbf16>
    %c0_6 = arith.constant 0 : index
    %c0_7 = arith.constant 0 : index
    %9 = vector.load %arg4[%c0_6, %c0_7] : memref<64x128xbf16, #tpu.memory_space<vmem>>, vector<64x128xbf16>
    tpu.vector_store %arg4[%c0_6, %c0_7], %8 {strides = array<i32>} : memref<64x128xbf16, #tpu.memory_space<vmem>>, vector<64x128xbf16>,
    return
  }
  func.func @transform_0(%arg0: i32) -> (i32, i32) {
    %c0_i32 = arith.constant 0 : i32
    %c0_i32_0 = arith.constant 0 : i32
    return %arg0, %c0_i32 : i32, i32
  }
  func.func @transform_1(%arg0: i32) -> (i32, i32) {
    %c0_i32 = arith.constant 0 : i32
    %c0_i32_0 = arith.constant 0 : i32
    %c0_i32_1 = arith.constant 0 : i32
    return %c0_i32, %c0_i32_0 : i32, i32
  }
  func.func @transform_2(%arg0: i32) -> (i32, i32) {
    %c0_i32 = arith.constant 0 : i32
    %c0_i32_0 = arith.constant 0 : i32
    %c0_i32_1 = arith.constant 0 : i32
    return %c0_i32, %c0_i32_0 : i32, i32
  }
  func.func @transform_3(%arg0: i32) -> (i32, i32) {
    %c0_i32 = arith.constant 0 : i32
    %c0_i32_0 = arith.constant 0 : i32
    return %arg0, %c0_i32 : i32, i32
  }
}

module attributes {stable_mosaic.version = 11 : i64} {
  func.func @_gemm_bn_kernel(%arg0: i32, %arg1: memref<64x128xbf16, #tpu.memory_space<vmem>>, %arg2: memref<128x128xbf16, #tpu.memory_space<vmem>>, %arg3: memref<1x128xf32, #tpu.memory_space<vmem>>, %arg4: memref<64x128xf32, #tpu.memory_space<vmem>>) attributes {dimension_semantics = [#tpu.dimension_semantics<parallel>], iteration_bounds = array<i64: 2>, scalar_prefetch = 0 : i64, scratch_operands = 0 : i64, tpu.core_type = #tpu.core_type<tc>, window_params = [{transform_indices = @transform_0, window_bounds = array<i64: 64, 128>}, {pipeline_mode = #tpu.pipeline_mode<synchronous>, transform_indices = @transform_1, window_bounds = array<i64: 128, 128>}, {pipeline_mode = #tpu.pipeline_mode<synchronous>, transform_indices = @transform_2, window_bounds = array<i64: 1, 128>}, {transform_indices = @transform_3, window_bounds = array<i64: 64, 128>}]} {
    %c0 = arith.constant 0 : index
    %c0_0 = arith.constant 0 : index
    %0 = vector.load %arg1[%c0, %c0_0] : memref<64x128xbf16, #tpu.memory_space<vmem>>, vector<64x128xbf16>
    %c0_1 = arith.constant 0 : index
    %c0_2 = arith.constant 0 : index
    %1 = vector.load %arg2[%c0_1, %c0_2] : memref<128x128xbf16, #tpu.memory_space<vmem>>, vector<128x128xbf16>
    %cst = arith.constant dense<0.000000e+00> : vector<64x128xf32>
    %2 = tpu.matmul %0, %1, %cst {dimension_numbers = #tpu.dot_dimension_numbers<[1], [0], [0], [1], [0, 0, 1, 1], [], []>} : vector<64x128xbf16>, vector<128x128xbf16>, vector<64x128xf32> -> vector<64x128xf32>
    %c0_3 = arith.constant 0 : index
    %c0_4 = arith.constant 0 : index
    %3 = vector.load %arg3[%c0_3, %c0_4] : memref<1x128xf32, #tpu.memory_space<vmem>>, vector<1x128xf32>
    %4 = vector.broadcast %3 : vector<1x128xf32> to vector<64x128xf32>
    %5 = arith.addf %2, %4 : vector<64x128xf32>
    %c0_5 = arith.constant 0 : index
    %c0_6 = arith.constant 0 : index
    %6 = vector.load %arg4[%c0_5, %c0_6] : memref<64x128xf32, #tpu.memory_space<vmem>>, vector<64x128xf32>
    tpu.vector_store %arg4[%c0_5, %c0_6], %5 {strides = array<i32>} : memref<64x128xf32, #tpu.memory_space<vmem>>, vector<64x128xf32>,
    return
  }
  func.func @transform_0(%arg0: i32) -> (i32, i32) {
    %c0_i32 = arith.constant 0 : i32
    %c0_i32_0 = arith.constant 0 : i32
    return %arg0, %c0_i32 : i32, i32
  }
  func.func @transform_1(%arg0: i32) -> (i32, i32) {
    %c0_i32 = arith.constant 0 : i32
    %c0_i32_0 = arith.constant 0 : i32
    %c0_i32_1 = arith.constant 0 : i32
    return %c0_i32, %c0_i32_0 : i32, i32
  }
  func.func @transform_2(%arg0: i32) -> (i32, i32) {
    %c0_i32 = arith.constant 0 : i32
    %c0_i32_0 = arith.constant 0 : i32
    %c0_i32_1 = arith.constant 0 : i32
    return %c0_i32, %c0_i32_0 : i32, i32
  }
  func.func @transform_3(%arg0: i32) -> (i32, i32) {
    %c0_i32 = arith.constant 0 : i32
    %c0_i32_0 = arith.constant 0 : i32
    return %arg0, %c0_i32 : i32, i32
  }
}

</mosaic_0001>

<llo_original>
// kernel: block_forward.2
$region0: #{block_forward.2}
  #allocation0 [shape = 'u32[]', space=smem, size = 0x4, offset = 0x4, fixed_abs, tag = 'smem constant byte address 0x4 - core index']
  #allocation1 [shape = 'u32[72,128]{1,0:T(1,128)}', space=vmem, size = 0x9000, scoped, tag = 'internal scratch']
  %s0 = inlined_call_operand.vmem [shape: bf16[128,128], index: 0, kind: input, shape index: {}]
  %s1 = inlined_call_operand.vmem [shape: bf16[128,128], index: 1, kind: input, shape index: {}]
  %s2 = inlined_call_operand.vmem [shape: f32[1,128], index: 2, kind: input, shape index: {}]
  %s3 = inlined_call_operand.vmem [shape: bf16[128,128], index: 3, kind: output, shape index: {}]
  %s4 = sld [smem:[#allocation0]]
  $region45: #{block_forward.2} parent=0
    _
  %s6 = ssub.s32 1, %s4
  %s7 = scalar_select 0, %s6, %s4
  loop: start=0, step=1, limit=4
  $region2: #{block_forward.2} parent=0 // loop_pre_header
    _
  $region3: #{block_forward.2} parent=0 // loop_header
    %s9 = sphi 0, %s13
    %p10 = scmp.ge.s32.totalorder %s9, 4
    %s19 = sphi 0, %s21
    %s22 = sphi 0, %s19
    %s23 = sphi 0, %s22
    %s39 = sphi 0, %s23
    %s43 = sphi 0, %s43
    %s45 = sphi 0, %s43
    %s46 = sphi 0, %s45
    %s60 = sphi 0, %s46
    %s64 = sphi 0, %s64
    %s66 = sphi 0, %s64
    %s67 = sphi 0, %s66
    %s81 = sphi 0, %s67
    %s87 = sphi 0, %s89
    %s90 = sphi 0, %s87
    %s91 = sphi 0, %s90
    %s107 = sphi 0, %s91
  $region4: #{block_forward.2} parent=0 // loop_header_branch
    %12 = sbr.rel (%p10) target = $region8
  $region5: #{block_forward.2} parent=0 // loop_body
    %s14 = ssub.s32 %s9, 1
    %s15 = ssub.s32 %s9, 2
    %s16 = sadd.s32 %s9, 1
    %s17 = ssub.s32 %s9, %s16
    %p18 = scmp.eq.s32.totalorder %s17, 0
    %s20 = sadd.s32 %s19, 1
    %s21 = scalar_select %p18, %s19, %s20
    %p24 = pneg %p18
    %p25 = scmp.eq.s32.totalorder %s9, 1
    %p26 = por %p24, %p25
    %p27 = scmp.ne.s32.totalorder %s19, %s22
    %p28 = scmp.eq.s32.totalorder %s9, 0
    %p29 = por %p27, %p28
    %p30 = scmp.ne.s32.totalorder %s19, %s22
    %p31 = scmp.eq.s32.totalorder %s14, 1
    %p32 = por %p30, %p31
    %p33 = scmp.ne.s32.totalorder %s22, %s23
    %p34 = scmp.eq.s32.totalorder %s14, 0
    %p35 = por %p33, %p34
    %p36 = scmp.ne.s32.totalorder %s22, %s23
    %p37 = scmp.eq.s32.totalorder %s15, 1
    %p38 = por %p36, %p37
    %p40 = scmp.ne.s32.totalorder %s23, %s39
    %p41 = scmp.eq.s32.totalorder %s15, 0
    %p42 = por %p40, %p41
    %s44 = sadd.s32 %s43, 1
    %p47 = scmp.eq.s32.totalorder %s9, 1
    %p48 = scmp.ne.s32.totalorder %s43, %s45
    %p49 = scmp.eq.s32.totalorder %s9, 0
    %p50 = por %p48, %p49
    %p51 = scmp.ne.s32.totalorder %s43, %s45
    %p52 = scmp.eq.s32.totalorder %s14, 1
    %p53 = por %p51, %p52
    %p54 = scmp.ne.s32.totalorder %s45, %s46
    %p55 = scmp.eq.s32.totalorder %s14, 0
    %p56 = por %p54, %p55
    %p57 = scmp.ne.s32.totalorder %s45, %s46
    %p58 = scmp.eq.s32.totalorder %s15, 1
    %p59 = por %p57, %p58
    %p61 = scmp.ne.s32.totalorder %s46, %s60
    %p62 = scmp.eq.s32.totalorder %s15, 0
    %p63 = por %p61, %p62
    %s65 = sadd.s32 %s64, 1
    %p68 = scmp.eq.s32.totalorder %s9, 1
    %p69 = scmp.ne.s32.totalorder %s64, %s66
    %p70 = scmp.eq.s32.totalorder %s9, 0
    %p71 = por %p69, %p70
    %p72 = scmp.ne.s32.totalorder %s64, %s66
    %p73 = scmp.eq.s32.totalorder %s14, 1
    %p74 = por %p72, %p73
    %p75 = scmp.ne.s32.totalorder %s66, %s67
    %p76 = scmp.eq.s32.totalorder %s14, 0
    %p77 = por %p75, %p76
    %p78 = scmp.ne.s32.totalorder %s66, %s67
    %p79 = scmp.eq.s32.totalorder %s15, 1
    %p80 = por %p78, %p79
    %p82 = scmp.ne.s32.totalorder %s67, %s81
    %p83 = scmp.eq.s32.totalorder %s15, 0
    %p84 = por %p82, %p83
    %s85 = ssub.s32 %s9, %s16
    %p86 = scmp.eq.s32.totalorder %s85, 0
    %s88 = sadd.s32 %s87, 1
    %s89 = scalar_select %p86, %s87, %s88
    %p92 = pneg %p86
    %p93 = scmp.eq.s32.totalorder %s9, 1
    %p94 = por %p92, %p93
    %p95 = scmp.ne.s32.totalorder %s87, %s90
    %p96 = scmp.eq.s32.totalorder %s9, 0
    %p97 = por %p95, %p96
    %p98 = scmp.ne.s32.totalorder %s87, %s90
    %p99 = scmp.eq.s32.totalorder %s14, 1
    %p100 = por %p98, %p99
    %p101 = scmp.ne.s32.totalorder %s90, %s91
    %p102 = scmp.eq.s32.totalorder %s14, 0
    %p103 = por %p101, %p102
    %p104 = scmp.ne.s32.totalorder %s90, %s91
    %p105 = scmp.eq.s32.totalorder %s15, 1
    %p106 = por %p104, %p105
    %p108 = scmp.ne.s32.totalorder %s91, %s107
    %p109 = scmp.eq.s32.totalorder %s15, 0
    %p110 = por %p108, %p109
    %p111 = scmp.le.s32.totalorder 1, %s9
    %p112 = scmp.lt.s32.totalorder %s9, 3
    %p113 = pnand %p111, %p112
    %p114 = pneg %p113
    // Predicated region
    $region9: #{block_forward.2} parent=5 // pred_check
      _
    $region10: #{block_forward.2} parent=5 // pred_check_branch
      %116 = sbr.rel (%p113) target = $region12
    $region11: #{block_forward.2} parent=5 // pred_region
      %s117 = ssub.s32 %s9, 1
      // Predicated region
      $region13: #{block_forward.2} parent=11 // pred_check
        %p118 = pneg %p56
      $region14: #{block_forward.2} parent=11 // pred_check_branch
        %120 = sbr.rel (%p118) target = $region16
      $region15: #{block_forward.2} parent=11 // pred_region
        _
      $region16: #{block_forward.2} parent=11 // pred_fallthru
        _
      // Predicated region
      $region17: #{block_forward.2} parent=11 // pred_check
        %p121 = pneg %p77
      $region18: #{block_forward.2} parent=11 // pred_check_branch
        %123 = sbr.rel (%p121) target = $region20
      $region19: #{block_forward.2} parent=11 // pred_region
        _
      $region20: #{block_forward.2} parent=11 // pred_fallthru
        _
    $region12: #{block_forward.2} parent=5 // pred_fallthru
      _
    %p124 = scmp.lt.s32.totalorder %s9, 2
    // Predicated region
    $region21: #{block_forward.2} parent=5 // pred_check
      %p125 = pneg %p124
    $region22: #{block_forward.2} parent=5 // pred_check_branch
      %127 = sbr.rel (%p125) target = $region24
    $region23: #{block_forward.2} parent=5 // pred_region
      // Predicated region
      $region25: #{block_forward.2} parent=23 // pred_check
        %p128 = pneg %p29
      $region26: #{block_forward.2} parent=23 // pred_check_branch
        %130 = sbr.rel (%p128) target = $region28
      $region27: #{block_forward.2} parent=23 // pred_region
        %s131 = smul.u32 8, %s9
        %p132 = scmp.lt.s32.totalorder %s131, 15
        %s133 = scalar_select %p132, %s131, 15
        %s134 = smul.addr %s133, 4
        %s135 = scalar_lea.vmem %s0, %s134
        %s136 = smul.u32 8, %s9
      $region28: #{block_forward.2} parent=23 // pred_fallthru
        _
    $region24: #{block_forward.2} parent=5 // pred_fallthru
      _
    %p137 = scmp.le.s32.totalorder 1, %s9
    %p138 = scmp.lt.s32.totalorder %s9, 3
    %p139 = pnand %p137, %p138
    %p140 = pneg %p139
    // Predicated region
    $region29: #{block_forward.2} parent=5 // pred_check
      _
    $region30: #{block_forward.2} parent=5 // pred_check_branch
      %142 = sbr.rel (%p139) target = $region32
    $region31: #{block_forward.2} parent=5 // pred_region
      %s143 = ssub.s32 %s9, 1
      %s144 = smul.u32 8, %s14
      %p145 = scmp.lt.s32.totalorder %s144, 15
      %s146 = scalar_select %p145, %s144, 15
      %s147 = smul.addr %s146, 4
      %s148 = scalar_lea.vmem %s0, %s147
      %p149 = pneg %p35
      %p150 = pneg %p32
      %p151 = pneg %p56
      %p152 = pneg %p53
      %p153 = pneg %p77
      %p154 = pneg %p74
      %p155 = pneg %p103
      %p156 = pneg %p100
      %s157 = smul.u32 8, %s14
      %p158 = scmp.lt.s32.totalorder %s157, 15
      %s159 = scalar_select %p158, %s157, 15
      %s160 = smul.addr %s159, 4
      %s161 = scalar_lea.vmem %s3, %s160
      %s162 = smul.u32 8, %s14
      %p163 = scmp.lt.s32.totalorder %s162, 15
      %s164 = scalar_select %p163, %s162, 15
      %s165 = smul.addr %s164, 4
      %s166 = scalar_lea.vmem %s0, %s165
      %s167 = smul.u32 8, %s14
      %s168 = smul.u32 8, %s14
      %p169 = scmp.lt.s32.totalorder %s168, 15
      %s170 = scalar_select %p169, %s168, 15
      %s171 = smul.addr %s170, 4
      %s172 = scalar_lea.vmem %s3, %s171
      %s173 = smul.u32 8, %s14
      %v174 = vld [vmem:[%s166] sm:$0xf]
      %v175 = vld [vmem:[%s166 + $0x4] sm:$0xf]
      %v176 = vld [vmem:[%s166 + $0x8] sm:$0xf]
      %v177 = vld [vmem:[%s166 + $0xc] sm:$0xf]
      %v178 = vld [vmem:[%s166 + $0x10] sm:$0xf]
      %v179 = vld [vmem:[%s166 + $0x14] sm:$0xf]
      %v180 = vld [vmem:[%s166 + $0x18] sm:$0xf]
      %v181 = vld [vmem:[%s166 + $0x1c] sm:$0xf]
      %v182 = vld [vmem:[%s1] sm:$0xf]
      %v183 = vld [vmem:[%s1 + $0x4] sm:$0xf]
      %v184 = vld [vmem:[%s1 + $0x8] sm:$0xf]
      %v185 = vld [vmem:[%s1 + $0xc] sm:$0xf]
      %v186 = vld [vmem:[%s1 + $0x10] sm:$0xf]
      %v187 = vld [vmem:[%s1 + $0x14] sm:$0xf]
      %v188 = vld [vmem:[%s1 + $0x18] sm:$0xf]
      %v189 = vld [vmem:[%s1 + $0x1c] sm:$0xf]
      %v190 = vld [vmem:[%s1 + $0x20] sm:$0xf]
      %v191 = vld [vmem:[%s1 + $0x24] sm:$0xf]
      %v192 = vld [vmem:[%s1 + $0x28] sm:$0xf]
      %v193 = vld [vmem:[%s1 + $0x2c] sm:$0xf]
      %v194 = vld [vmem:[%s1 + $0x30] sm:$0xf]
      %v195 = vld [vmem:[%s1 + $0x34] sm:$0xf]
      %v196 = vld [vmem:[%s1 + $0x38] sm:$0xf]
      %v197 = vld [vmem:[%s1 + $0x3c] sm:$0xf]
      %v198 = vld [vmem:[%s2] sm:$0x1]
      %v200 = vperm.slane %v198, 0
      %v210 = vunpack.c.l.b16 %v174
      %v211 = vunpack.c.l.b16 %v175
      %v212 = vunpack.c.l.b16 %v176
      %v213 = vunpack.c.l.b16 %v177
      %v214 = vunpack.c.l.b16 %v178
      %v215 = vunpack.c.l.b16 %v179
      %v216 = vunpack.c.l.b16 %v180
      %v217 = vunpack.c.l.b16 %v181
      %v218 = vpack.c.b16 %v211, %v210
      %v219 = vpack.c.b16 %v213, %v212
      %v220 = vpack.c.b16 %v215, %v214
      %v221 = vpack.c.b16 %v217, %v216
      %v242 = vunpack.c.l.b16 %v182
      %v243 = vunpack.c.l.b16 %v183
      %v244 = vunpack.c.l.b16 %v184
      %v245 = vunpack.c.l.b16 %v185
      %v246 = vunpack.c.l.b16 %v186
      %v247 = vunpack.c.l.b16 %v187
      %v248 = vunpack.c.l.b16 %v188
      %v249 = vunpack.c.l.b16 %v189
      %v250 = vunpack.c.l.b16 %v190
      %v251 = vunpack.c.l.b16 %v191
      %v252 = vunpack.c.l.b16 %v192
      %v253 = vunpack.c.l.b16 %v193
      %v254 = vunpack.c.l.b16 %v194
      %v255 = vunpack.c.l.b16 %v195
      %v256 = vunpack.c.l.b16 %v196
      %v257 = vunpack.c.l.b16 %v197
      %v258 = vpack.c.b16 %v243, %v242
      %v259 = vpack.c.b16 %v245, %v244
      %v260 = vpack.c.b16 %v247, %v246
      %v261 = vpack.c.b16 %v249, %v248
      %v262 = vpack.c.b16 %v251, %v250
      %v263 = vpack.c.b16 %v253, %v252
      %v264 = vpack.c.b16 %v255, %v254
      %v265 = vpack.c.b16 %v257, %v256
      %274 = vmatpush.bf16.msra.mxu0 %v265
      %275 = vmatpush.bf16.msra.mxu0 %v264
      %276 = vmatpush.bf16.msra.mxu0 %v263
      %277 = vmatpush.bf16.msra.mxu0 %v262
      %278 = vmatpush.bf16.msra.mxu0 %v261
      %279 = vmatpush.bf16.msra.mxu0 %v260
      %280 = vmatpush.bf16.msra.mxu0 %v259
      %281 = vmatpush.bf16.msra.mxu0 %v258
      %282 = vmatmul.bf16.gmra.mxu0 %v218
      %v283 = vpop.f32.mrf.mxu0
      %v284 = vadd.f32 %v200, %v283
      %v285 = vpop.f32.mrf.mxu0
      %v286 = vadd.f32 %v200, %v285
      %287 = vmatmul.bf16.gmra.mxu0 %v219
      %v288 = vpop.f32.mrf.mxu0
      %v289 = vadd.f32 %v200, %v288
      %v290 = vpop.f32.mrf.mxu0
      %v291 = vadd.f32 %v200, %v290
      %292 = vmatmul.bf16.gmra.mxu0 %v220
      %v293 = vpop.f32.mrf.mxu0
      %v294 = vadd.f32 %v200, %v293
      %v295 = vpop.f32.mrf.mxu0
      %v296 = vadd.f32 %v200, %v295
      %297 = vmatmul.bf16.gmra.mxu0 %v221
      %v298 = vpop.f32.mrf.mxu0
      %v299 = vadd.f32 %v200, %v298
      %v300 = vpop.f32.mrf.mxu0
      %v301 = vadd.f32 %v200, %v300
      %302 = vdwg.mxu0
      %v303 = vmax.f32 %v284, 0.0
      %v304 = vmax.f32 %v286, 0.0
      %v305 = vmax.f32 %v289, 0.0
      %v306 = vmax.f32 %v291, 0.0
      %v307 = vmax.f32 %v294, 0.0
      %v308 = vmax.f32 %v296, 0.0
      %v309 = vmax.f32 %v299, 0.0
      %v310 = vmax.f32 %v301, 0.0
      %v311 = vpack.c.bf16 %v303, %v303
      %v312 = vpack.c.bf16 %v304, %v304
      %v313 = vpack.c.bf16 %v305, %v305
      %v314 = vpack.c.bf16 %v306, %v306
      %v315 = vpack.c.bf16 %v307, %v307
      %v316 = vpack.c.bf16 %v308, %v308
      %v317 = vpack.c.bf16 %v309, %v309
      %v318 = vpack.c.bf16 %v310, %v310
      %319 = vst [vmem:[%s172] sm:$0xf] %v311
      %320 = vst [vmem:[%s172 + $0x4] sm:$0xf] %v312
      %321 = vst [vmem:[%s172 + $0x8] sm:$0xf] %v313
      %322 = vst [vmem:[%s172 + $0xc] sm:$0xf] %v314
      %323 = vst [vmem:[%s172 + $0x10] sm:$0xf] %v315
      %324 = vst [vmem:[%s172 + $0x14] sm:$0xf] %v316
      %325 = vst [vmem:[%s172 + $0x18] sm:$0xf] %v317
      %326 = vst [vmem:[%s172 + $0x1c] sm:$0xf] %v318
      %s327 = smul.u32 8, %s14
      %p328 = scmp.lt.s32.totalorder %s327, 15
      %s329 = scalar_select %p328, %s327, 15
      %s330 = smul.addr %s329, 4
      %s331 = scalar_lea.vmem %s3, %s330
      // Predicated region
      $region33: #{block_forward.2} parent=31 // pred_check
        %p332 = pneg %p100
      $region34: #{block_forward.2} parent=31 // pred_check_branch
        %334 = sbr.rel (%p332) target = $region36
      $region35: #{block_forward.2} parent=31 // pred_region
        %s335 = smul.u32 8, %s14
      $region36: #{block_forward.2} parent=31 // pred_fallthru
        _
    $region32: #{block_forward.2} parent=5 // pred_fallthru
      _
    %p336 = scmp.le.s32.totalorder 2, %s9
    // Predicated region
    $region37: #{block_forward.2} parent=5 // pred_check
      %p337 = pneg %p336
    $region38: #{block_forward.2} parent=5 // pred_check_branch
      %339 = sbr.rel (%p337) target = $region40
    $region39: #{block_forward.2} parent=5 // pred_region
      %s340 = ssub.s32 %s9, 2
      // Predicated region
      $region41: #{block_forward.2} parent=39 // pred_check
        %p341 = pneg %p106
      $region42: #{block_forward.2} parent=39 // pred_check_branch
        %343 = sbr.rel (%p341) target = $region44
      $region43: #{block_forward.2} parent=39 // pred_region
        %s344 = smul.u32 8, %s15
        %p345 = scmp.lt.s32.totalorder %s344, 15
        %s346 = scalar_select %p345, %s344, 15
        %s347 = smul.addr %s346, 4
        %s348 = scalar_lea.vmem %s3, %s347
      $region44: #{block_forward.2} parent=39 // pred_fallthru
        _
    $region40: #{block_forward.2} parent=5 // pred_fallthru
      _
  $region6: #{block_forward.2} parent=0 // loop_footer
    %s13 = sadd.s32 1, %s9
  $region7: #{block_forward.2} parent=0 // loop_footer_branch
    %8 = sbr.rel target = $region3
  $region8: #{block_forward.2} parent=0 // loop_exit
    _

// kernel: block_forward.3
$region0: #{block_forward.3}
  #allocation0 [shape = 'u32[]', space=smem, size = 0x4, offset = 0x4, fixed_abs, tag = 'smem constant byte address 0x4 - core index']
  #allocation1 [shape = 'u32[72,128]{1,0:T(1,128)}', space=vmem, size = 0x9000, scoped, tag = 'internal scratch']
  %s0 = inlined_call_operand.vmem [shape: bf16[128,128], index: 0, kind: input, shape index: {}]
  %s1 = inlined_call_operand.vmem [shape: bf16[128,128], index: 1, kind: input, shape index: {}]
  %s2 = inlined_call_operand.vmem [shape: f32[1,128], index: 2, kind: input, shape index: {}]
  %s3 = inlined_call_operand.vmem [shape: f32[128,128], index: 3, kind: output, shape index: {}]
  %s4 = sld [smem:[#allocation0]]
  $region45: #{block_forward.3} parent=0
    _
  %s6 = ssub.s32 1, %s4
  %s7 = scalar_select 0, %s6, %s4
  loop: start=0, step=1, limit=4
  $region2: #{block_forward.3} parent=0 // loop_pre_header
    _
  $region3: #{block_forward.3} parent=0 // loop_header
    %s9 = sphi 0, %s13
    %p10 = scmp.ge.s32.totalorder %s9, 4
    %s19 = sphi 0, %s21
    %s22 = sphi 0, %s19
    %s23 = sphi 0, %s22
    %s39 = sphi 0, %s23
    %s43 = sphi 0, %s43
    %s45 = sphi 0, %s43
    %s46 = sphi 0, %s45
    %s60 = sphi 0, %s46
    %s64 = sphi 0, %s64
    %s66 = sphi 0, %s64
    %s67 = sphi 0, %s66
    %s81 = sphi 0, %s67
    %s87 = sphi 0, %s89
    %s90 = sphi 0, %s87
    %s91 = sphi 0, %s90
    %s107 = sphi 0, %s91
  $region4: #{block_forward.3} parent=0 // loop_header_branch
    %12 = sbr.rel (%p10) target = $region8
  $region5: #{block_forward.3} parent=0 // loop_body
    %s14 = ssub.s32 %s9, 1
    %s15 = ssub.s32 %s9, 2
    %s16 = sadd.s32 %s9, 1
    %s17 = ssub.s32 %s9, %s16
    %p18 = scmp.eq.s32.totalorder %s17, 0
    %s20 = sadd.s32 %s19, 1
    %s21 = scalar_select %p18, %s19, %s20
    %p24 = pneg %p18
    %p25 = scmp.eq.s32.totalorder %s9, 1
    %p26 = por %p24, %p25
    %p27 = scmp.ne.s32.totalorder %s19, %s22
    %p28 = scmp.eq.s32.totalorder %s9, 0
    %p29 = por %p27, %p28
    %p30 = scmp.ne.s32.totalorder %s19, %s22
    %p31 = scmp.eq.s32.totalorder %s14, 1
    %p32 = por %p30, %p31
    %p33 = scmp.ne.s32.totalorder %s22, %s23
    %p34 = scmp.eq.s32.totalorder %s14, 0
    %p35 = por %p33, %p34
    %p36 = scmp.ne.s32.totalorder %s22, %s23
    %p37 = scmp.eq.s32.totalorder %s15, 1
    %p38 = por %p36, %p37
    %p40 = scmp.ne.s32.totalorder %s23, %s39
    %p41 = scmp.eq.s32.totalorder %s15, 0
    %p42 = por %p40, %p41
    %s44 = sadd.s32 %s43, 1
    %p47 = scmp.eq.s32.totalorder %s9, 1
    %p48 = scmp.ne.s32.totalorder %s43, %s45
    %p49 = scmp.eq.s32.totalorder %s9, 0
    %p50 = por %p48, %p49
    %p51 = scmp.ne.s32.totalorder %s43, %s45
    %p52 = scmp.eq.s32.totalorder %s14, 1
    %p53 = por %p51, %p52
    %p54 = scmp.ne.s32.totalorder %s45, %s46
    %p55 = scmp.eq.s32.totalorder %s14, 0
    %p56 = por %p54, %p55
    %p57 = scmp.ne.s32.totalorder %s45, %s46
    %p58 = scmp.eq.s32.totalorder %s15, 1
    %p59 = por %p57, %p58
    %p61 = scmp.ne.s32.totalorder %s46, %s60
    %p62 = scmp.eq.s32.totalorder %s15, 0
    %p63 = por %p61, %p62
    %s65 = sadd.s32 %s64, 1
    %p68 = scmp.eq.s32.totalorder %s9, 1
    %p69 = scmp.ne.s32.totalorder %s64, %s66
    %p70 = scmp.eq.s32.totalorder %s9, 0
    %p71 = por %p69, %p70
    %p72 = scmp.ne.s32.totalorder %s64, %s66
    %p73 = scmp.eq.s32.totalorder %s14, 1
    %p74 = por %p72, %p73
    %p75 = scmp.ne.s32.totalorder %s66, %s67
    %p76 = scmp.eq.s32.totalorder %s14, 0
    %p77 = por %p75, %p76
    %p78 = scmp.ne.s32.totalorder %s66, %s67
    %p79 = scmp.eq.s32.totalorder %s15, 1
    %p80 = por %p78, %p79
    %p82 = scmp.ne.s32.totalorder %s67, %s81
    %p83 = scmp.eq.s32.totalorder %s15, 0
    %p84 = por %p82, %p83
    %s85 = ssub.s32 %s9, %s16
    %p86 = scmp.eq.s32.totalorder %s85, 0
    %s88 = sadd.s32 %s87, 1
    %s89 = scalar_select %p86, %s87, %s88
    %p92 = pneg %p86
    %p93 = scmp.eq.s32.totalorder %s9, 1
    %p94 = por %p92, %p93
    %p95 = scmp.ne.s32.totalorder %s87, %s90
    %p96 = scmp.eq.s32.totalorder %s9, 0
    %p97 = por %p95, %p96
    %p98 = scmp.ne.s32.totalorder %s87, %s90
    %p99 = scmp.eq.s32.totalorder %s14, 1
    %p100 = por %p98, %p99
    %p101 = scmp.ne.s32.totalorder %s90, %s91
    %p102 = scmp.eq.s32.totalorder %s14, 0
    %p103 = por %p101, %p102
    %p104 = scmp.ne.s32.totalorder %s90, %s91
    %p105 = scmp.eq.s32.totalorder %s15, 1
    %p106 = por %p104, %p105
    %p108 = scmp.ne.s32.totalorder %s91, %s107
    %p109 = scmp.eq.s32.totalorder %s15, 0
    %p110 = por %p108, %p109
    %p111 = scmp.le.s32.totalorder 1, %s9
    %p112 = scmp.lt.s32.totalorder %s9, 3
    %p113 = pnand %p111, %p112
    %p114 = pneg %p113
    // Predicated region
    $region9: #{block_forward.3} parent=5 // pred_check
      _
    $region10: #{block_forward.3} parent=5 // pred_check_branch
      %116 = sbr.rel (%p113) target = $region12
    $region11: #{block_forward.3} parent=5 // pred_region
      %s117 = ssub.s32 %s9, 1
      // Predicated region
      $region13: #{block_forward.3} parent=11 // pred_check
        %p118 = pneg %p56
      $region14: #{block_forward.3} parent=11 // pred_check_branch
        %120 = sbr.rel (%p118) target = $region16
      $region15: #{block_forward.3} parent=11 // pred_region
        _
      $region16: #{block_forward.3} parent=11 // pred_fallthru
        _
      // Predicated region
      $region17: #{block_forward.3} parent=11 // pred_check
        %p121 = pneg %p77
      $region18: #{block_forward.3} parent=11 // pred_check_branch
        %123 = sbr.rel (%p121) target = $region20
      $region19: #{block_forward.3} parent=11 // pred_region
        _
      $region20: #{block_forward.3} parent=11 // pred_fallthru
        _
    $region12: #{block_forward.3} parent=5 // pred_fallthru
      _
    %p124 = scmp.lt.s32.totalorder %s9, 2
    // Predicated region
    $region21: #{block_forward.3} parent=5 // pred_check
      %p125 = pneg %p124
    $region22: #{block_forward.3} parent=5 // pred_check_branch
      %127 = sbr.rel (%p125) target = $region24
    $region23: #{block_forward.3} parent=5 // pred_region
      // Predicated region
      $region25: #{block_forward.3} parent=23 // pred_check
        %p128 = pneg %p29
      $region26: #{block_forward.3} parent=23 // pred_check_branch
        %130 = sbr.rel (%p128) target = $region28
      $region27: #{block_forward.3} parent=23 // pred_region
        %s131 = smul.u32 8, %s9
        %p132 = scmp.lt.s32.totalorder %s131, 15
        %s133 = scalar_select %p132, %s131, 15
        %s134 = smul.addr %s133, 4
        %s135 = scalar_lea.vmem %s0, %s134
        %s136 = smul.u32 8, %s9
      $region28: #{block_forward.3} parent=23 // pred_fallthru
        _
    $region24: #{block_forward.3} parent=5 // pred_fallthru
      _
    %p137 = scmp.le.s32.totalorder 1, %s9
    %p138 = scmp.lt.s32.totalorder %s9, 3
    %p139 = pnand %p137, %p138
    %p140 = pneg %p139
    // Predicated region
    $region29: #{block_forward.3} parent=5 // pred_check
      _
    $region30: #{block_forward.3} parent=5 // pred_check_branch
      %142 = sbr.rel (%p139) target = $region32
    $region31: #{block_forward.3} parent=5 // pred_region
      %s143 = ssub.s32 %s9, 1
      %s144 = smul.u32 8, %s14
      %p145 = scmp.lt.s32.totalorder %s144, 15
      %s146 = scalar_select %p145, %s144, 15
      %s147 = smul.addr %s146, 4
      %s148 = scalar_lea.vmem %s0, %s147
      %p149 = pneg %p35
      %p150 = pneg %p32
      %p151 = pneg %p56
      %p152 = pneg %p53
      %p153 = pneg %p77
      %p154 = pneg %p74
      %p155 = pneg %p103
      %p156 = pneg %p100
      %s157 = smul.u32 8, %s14
      %p158 = scmp.lt.s32.totalorder %s157, 15
      %s159 = scalar_select %p158, %s157, 15
      %s160 = smul.addr %s159, 8
      %s161 = scalar_lea.vmem %s3, %s160
      %s162 = smul.u32 8, %s14
      %p163 = scmp.lt.s32.totalorder %s162, 15
      %s164 = scalar_select %p163, %s162, 15
      %s165 = smul.addr %s164, 4
      %s166 = scalar_lea.vmem %s0, %s165
      %s167 = smul.u32 8, %s14
      %s168 = smul.u32 8, %s14
      %p169 = scmp.lt.s32.totalorder %s168, 15
      %s170 = scalar_select %p169, %s168, 15
      %s171 = smul.addr %s170, 8
      %s172 = scalar_lea.vmem %s3, %s171
      %s173 = smul.u32 8, %s14
      %v174 = vld [vmem:[%s166] sm:$0xf]
      %v175 = vld [vmem:[%s166 + $0x4] sm:$0xf]
      %v176 = vld [vmem:[%s166 + $0x8] sm:$0xf]
      %v177 = vld [vmem:[%s166 + $0xc] sm:$0xf]
      %v178 = vld [vmem:[%s166 + $0x10] sm:$0xf]
      %v179 = vld [vmem:[%s166 + $0x14] sm:$0xf]
      %v180 = vld [vmem:[%s166 + $0x18] sm:$0xf]
      %v181 = vld [vmem:[%s166 + $0x1c] sm:$0xf]
      %v182 = vld [vmem:[%s1] sm:$0xf]
      %v183 = vld [vmem:[%s1 + $0x4] sm:$0xf]
      %v184 = vld [vmem:[%s1 + $0x8] sm:$0xf]
      %v185 = vld [vmem:[%s1 + $0xc] sm:$0xf]
      %v186 = vld [vmem:[%s1 + $0x10] sm:$0xf]
      %v187 = vld [vmem:[%s1 + $0x14] sm:$0xf]
      %v188 = vld [vmem:[%s1 + $0x18] sm:$0xf]
      %v189 = vld [vmem:[%s1 + $0x1c] sm:$0xf]
      %v190 = vld [vmem:[%s1 + $0x20] sm:$0xf]
      %v191 = vld [vmem:[%s1 + $0x24] sm:$0xf]
      %v192 = vld [vmem:[%s1 + $0x28] sm:$0xf]
      %v193 = vld [vmem:[%s1 + $0x2c] sm:$0xf]
      %v194 = vld [vmem:[%s1 + $0x30] sm:$0xf]
      %v195 = vld [vmem:[%s1 + $0x34] sm:$0xf]
      %v196 = vld [vmem:[%s1 + $0x38] sm:$0xf]
      %v197 = vld [vmem:[%s1 + $0x3c] sm:$0xf]
      %v198 = vld [vmem:[%s2] sm:$0x1]
      %v200 = vperm.slane %v198, 0
      %v210 = vunpack.c.l.b16 %v174
      %v211 = vunpack.c.l.b16 %v175
      %v212 = vunpack.c.l.b16 %v176
      %v213 = vunpack.c.l.b16 %v177
      %v214 = vunpack.c.l.b16 %v178
      %v215 = vunpack.c.l.b16 %v179
      %v216 = vunpack.c.l.b16 %v180
      %v217 = vunpack.c.l.b16 %v181
      %v218 = vpack.c.b16 %v211, %v210
      %v219 = vpack.c.b16 %v213, %v212
      %v220 = vpack.c.b16 %v215, %v214
      %v221 = vpack.c.b16 %v217, %v216
      %v242 = vunpack.c.l.b16 %v182
      %v243 = vunpack.c.l.b16 %v183
      %v244 = vunpack.c.l.b16 %v184
      %v245 = vunpack.c.l.b16 %v185
      %v246 = vunpack.c.l.b16 %v186
      %v247 = vunpack.c.l.b16 %v187
      %v248 = vunpack.c.l.b16 %v188
      %v249 = vunpack.c.l.b16 %v189
      %v250 = vunpack.c.l.b16 %v190
      %v251 = vunpack.c.l.b16 %v191
      %v252 = vunpack.c.l.b16 %v192
      %v253 = vunpack.c.l.b16 %v193
      %v254 = vunpack.c.l.b16 %v194
      %v255 = vunpack.c.l.b16 %v195
      %v256 = vunpack.c.l.b16 %v196
      %v257 = vunpack.c.l.b16 %v197
      %v258 = vpack.c.b16 %v243, %v242
      %v259 = vpack.c.b16 %v245, %v244
      %v260 = vpack.c.b16 %v247, %v246
      %v261 = vpack.c.b16 %v249, %v248
      %v262 = vpack.c.b16 %v251, %v250
      %v263 = vpack.c.b16 %v253, %v252
      %v264 = vpack.c.b16 %v255, %v254
      %v265 = vpack.c.b16 %v257, %v256
      %274 = vmatpush.bf16.msra.mxu0 %v265
      %275 = vmatpush.bf16.msra.mxu0 %v264
      %276 = vmatpush.bf16.msra.mxu0 %v263
      %277 = vmatpush.bf16.msra.mxu0 %v262
      %278 = vmatpush.bf16.msra.mxu0 %v261
      %279 = vmatpush.bf16.msra.mxu0 %v260
      %280 = vmatpush.bf16.msra.mxu0 %v259
      %281 = vmatpush.bf16.msra.mxu0 %v258
      %282 = vmatmul.bf16.gmra.mxu0 %v218
      %v283 = vpop.f32.mrf.mxu0
      %v284 = vadd.f32 %v200, %v283
      %v285 = vpop.f32.mrf.mxu0
      %v286 = vadd.f32 %v200, %v285
      %287 = vmatmul.bf16.gmra.mxu0 %v219
      %v288 = vpop.f32.mrf.mxu0
      %v289 = vadd.f32 %v200, %v288
      %v290 = vpop.f32.mrf.mxu0
      %v291 = vadd.f32 %v200, %v290
      %292 = vmatmul.bf16.gmra.mxu0 %v220
      %v293 = vpop.f32.mrf.mxu0
      %v294 = vadd.f32 %v200, %v293
      %v295 = vpop.f32.mrf.mxu0
      %v296 = vadd.f32 %v200, %v295
      %297 = vmatmul.bf16.gmra.mxu0 %v221
      %v298 = vpop.f32.mrf.mxu0
      %v299 = vadd.f32 %v200, %v298
      %v300 = vpop.f32.mrf.mxu0
      %v301 = vadd.f32 %v200, %v300
      %302 = vdwg.mxu0
      %303 = vst [vmem:[%s172] sm:$0xff] %v284
      %304 = vst [vmem:[%s172 + $0x8] sm:$0xff] %v286
      %305 = vst [vmem:[%s172 + $0x10] sm:$0xff] %v289
      %306 = vst [vmem:[%s172 + $0x18] sm:$0xff] %v291
      %307 = vst [vmem:[%s172 + $0x20] sm:$0xff] %v294
      %308 = vst [vmem:[%s172 + $0x28] sm:$0xff] %v296
      %309 = vst [vmem:[%s172 + $0x30] sm:$0xff] %v299
      %310 = vst [vmem:[%s172 + $0x38] sm:$0xff] %v301
      %s311 = smul.u32 8, %s14
      %p312 = scmp.lt.s32.totalorder %s311, 15
      %s313 = scalar_select %p312, %s311, 15
      %s314 = smul.addr %s313, 8
      %s315 = scalar_lea.vmem %s3, %s314
      // Predicated region
      $region33: #{block_forward.3} parent=31 // pred_check
        %p316 = pneg %p100
      $region34: #{block_forward.3} parent=31 // pred_check_branch
        %318 = sbr.rel (%p316) target = $region36
      $region35: #{block_forward.3} parent=31 // pred_region
        %s319 = smul.u32 8, %s14
      $region36: #{block_forward.3} parent=31 // pred_fallthru
        _
    $region32: #{block_forward.3} parent=5 // pred_fallthru
      _
    %p320 = scmp.le.s32.totalorder 2, %s9
    // Predicated region
    $region37: #{block_forward.3} parent=5 // pred_check
      %p321 = pneg %p320
    $region38: #{block_forward.3} parent=5 // pred_check_branch
      %323 = sbr.rel (%p321) target = $region40
    $region39: #{block_forward.3} parent=5 // pred_region
      %s324 = ssub.s32 %s9, 2
      // Predicated region
      $region41: #{block_forward.3} parent=39 // pred_check
        %p325 = pneg %p106
      $region42: #{block_forward.3} parent=39 // pred_check_branch
        %327 = sbr.rel (%p325) target = $region44
      $region43: #{block_forward.3} parent=39 // pred_region
        %s328 = smul.u32 8, %s15
        %p329 = scmp.lt.s32.totalorder %s328, 15
        %s330 = scalar_select %p329, %s328, 15
        %s331 = smul.addr %s330, 8
        %s332 = scalar_lea.vmem %s3, %s331
      $region44: #{block_forward.3} parent=39 // pred_fallthru
        _
    $region40: #{block_forward.3} parent=5 // pred_fallthru
      _
  $region6: #{block_forward.3} parent=0 // loop_footer
    %s13 = sadd.s32 1, %s9
  $region7: #{block_forward.3} parent=0 // loop_footer_branch
    %8 = sbr.rel target = $region3
  $region8: #{block_forward.3} parent=0 // loop_exit
    _

</llo_original>
